<compile_context>
chip_gen: v5e
topology: v5e:2x2
jax: 0.10.0
libtpu: 0.0.40
codegen_flags: <defaults>
</compile_context>

<pallas_src>
import functools

import jax
import jax.numpy as jnp
from jax.experimental import pallas as pl
from jax.experimental.pallas import tpu as pltpu


def _softplus(x):
    # Numerically stable softplus: max(x, 0) + log1p(exp(-|x|)).
    # Matches torch.nn.Softplus(beta=1, threshold=20) to ~2e-9 for large x.
    return jnp.maximum(x, 0.0) + jnp.log1p(jnp.exp(-jnp.abs(x)))


def mlp_head_kernel(x_ref, w1_ref, b1_ref, w2_ref, b2_ref, wo_ref, bo_ref,
                    o_ref, *, softplus_dtype):
    # x_ref: [TB, in_dim] feature tile in its native row-major layout.
    x = x_ref[...].astype(jnp.float32)              # VPU upcast; HBM stream stays narrow

    # Layer 1 in "NT" form (contract the last dims, like q @ k^T): the result
    # is [hidden, TB] with the batch on the 128-lane axis, so the softplus
    # below uses every lane.
    h = jax.lax.dot_general(w1_ref[...], x, (((1,), (1,)), ((), ())),
                            preferred_element_type=jnp.float32) + b1_ref[...]
    h = _softplus(h.astype(softplus_dtype))         # EUP; bf16 here on v6e/v7x

    # Layer 2: standard [hidden, hidden] @ [hidden, TB] with f32 accumulation.
    h = jnp.dot(w2_ref[...], h.astype(jnp.float32),
                preferred_element_type=jnp.float32) + b2_ref[...]
    h = _softplus(h.astype(softplus_dtype))

    # out_layer: one output row -> VPU multiply + sublane (XLU) reduction; an
    # MXU pass with M=1 would be >99% idle.
    out = jnp.sum(wo_ref[...] * h.astype(jnp.float32), axis=0, keepdims=True)
    o_ref[...] = (out + bo_ref[...]).astype(o_ref.dtype)   # lane-dense [1, TB] store


def _round_up(x, m):
    return (x + m - 1) // m * m


def _pick_tiling(batch, block_b, align=128):
    """Pick the batch tile / grid for the 1-D batch grid.

    Big tiles amortize the ~0.35 us per-grid-step overhead; the tile is
    clamped to the (aligned) batch, and we keep >= 2 grid steps whenever the
    batch allows so the "parallel" axis gives both v7x TensorCores work.
    """
    b_ceil = _round_up(max(int(batch), 1), align)
    blk = min(_round_up(int(block_b), align), b_ceil)
    if b_ceil // blk < 2 and b_ceil >= 2 * align:
        blk = _round_up(pl.cdiv(b_ceil, 2), align)
    n_tiles = pl.cdiv(b_ceil, blk)
    return blk, n_tiles, n_tiles * blk


def mlp_head(feature, params, *, block_b=8192, compute_dtype=jnp.float32,
             softplus_dtype=None):
    """feature: [B, input_dim] -> [B, 1] float32 (PyTorch forward semantics).

    compute_dtype : dtype of the streamed feature.  bf16 halves the dominant
        HBM read on every generation (incl. v5e); matmuls / bias adds /
        accumulation stay f32 inside the kernel.
    softplus_dtype: dtype of the EUP-bound softplus.  Defaults to
        compute_dtype.  Use bf16 on v6e/v7x (~2x EUP throughput), float32 on
        v5e (no bf16 EUP/VPU) or for strict accuracy.
    """
    w1, b1, w2, b2, wo, bo = params            # torch layout: W [out, in], b [out]
    assert feature.ndim == 2
    B, in_dim = feature.shape
    hidden = w1.shape[0]
    if softplus_dtype is None:
        softplus_dtype = compute_dtype

    blk, n_tiles, b_pad = _pick_tiling(B, block_b)

    # Feature stays in its native [B, in_dim] layout; only dtype-cast and
    # (when B is not tile-aligned) zero-pad the batch.  A tile-aligned batch
    # from the producer makes this a no-op.
    x = feature if feature.dtype == compute_dtype else feature.astype(compute_dtype)
    if b_pad != B:
        x = jnp.pad(x, ((0, b_pad - B), (0, 0)))

    # Parameters are tiny: keep them f32 and VMEM-resident.
    f32 = jnp.float32
    w1c = w1.astype(f32)
    w2c = w2.astype(f32)
    b1c = b1.astype(f32).reshape(hidden, 1)
    b2c = b2.astype(f32).reshape(hidden, 1)
    wo_col = wo.astype(f32).reshape(1, hidden).T      # [hidden, 1] column for the VPU reduce
    boc = bo.astype(f32).reshape(1, 1)

    resident = lambda i: (0, 0)                       # one block, stays in VMEM

    # Explicit VMEM budget (the [blk, 16] feature tile lane-pads to 128 in VMEM).
    cb = jnp.dtype(compute_dtype).itemsize
    est = (2 * blk * 128 * cb          # feature tile, double-buffered
           + blk * 128 * 4             # f32 upcast of the feature tile
           + 4 * hidden * blk * 4      # h intermediates / casts / relayouts
           + 2 * 8 * blk * 4           # output tile, double-buffered
           + (1 << 20))                # params + misc
    vmem_limit = int(max(32 << 20, min(est + (8 << 20), 64 << 20)))  # cap for v7x

    cost = pl.CostEstimate(
        flops=2 * b_pad * (in_dim * hidden + hidden * hidden + hidden),
        transcendentals=4 * hidden * b_pad,           # exp + log1p per softplus, 2 layers
        bytes_accessed=int(b_pad * in_dim * cb + b_pad * 4
                           + (in_dim * hidden + hidden * hidden + 3 * hidden + 2) * 4),
    )

    out_t = pl.pallas_call(
        functools.partial(mlp_head_kernel, softplus_dtype=softplus_dtype),
        out_shape=jax.ShapeDtypeStruct((1, b_pad), jnp.float32),
        grid_spec=pltpu.PrefetchScalarGridSpec(
            num_scalar_prefetch=0,
            grid=(n_tiles,),
            in_specs=[
                pl.BlockSpec((blk, in_dim), lambda i: (i, 0)),   # feature tile (native layout)
                pl.BlockSpec((hidden, in_dim), resident),        # W1
                pl.BlockSpec((hidden, 1), resident),             # b1
                pl.BlockSpec((hidden, hidden), resident),        # W2
                pl.BlockSpec((hidden, 1), resident),             # b2
                pl.BlockSpec((hidden, 1), resident),             # Wo^T column
                pl.BlockSpec((1, 1), resident),                  # bo
            ],
            out_specs=pl.BlockSpec((1, blk), lambda i: (0, i)),
        ),
        compiler_params=pltpu.CompilerParams(
            dimension_semantics=("parallel",),        # shard batch tiles across TCs (v7x)
            vmem_limit_bytes=vmem_limit,
        ),
        cost_estimate=cost,
    )(x, w1c, b1c, w2c, b2c, wo_col, boc)

    return out_t[0, :B].reshape(B, 1)


def init_params(key, input_dim, hidden_dim):
    """PyTorch-style uniform init U(-1/sqrt(fan_in), 1/sqrt(fan_in)); W is [out, in]."""
    ks = jax.random.split(key, 6)

    def lin(kw, kb, fan_in, fan_out):
        bound = 1.0 / jnp.sqrt(jnp.float32(fan_in))
        w = jax.random.uniform(kw, (fan_out, fan_in), jnp.float32, -bound, bound)
        b = jax.random.uniform(kb, (fan_out,), jnp.float32, -bound, bound)
        return w, b

    w1, b1 = lin(ks[0], ks[1], input_dim, hidden_dim)
    w2, b2 = lin(ks[2], ks[3], hidden_dim, hidden_dim)
    wo, bo = lin(ks[4], ks[5], hidden_dim, 1)
    return (w1, b1, w2, b2, wo, bo)


def mlp_head_ref(feature, params):
    w1, b1, w2, b2, wo, bo = params
    h = _softplus(feature @ w1.T + b1)
    h = _softplus(h @ w2.T + b2)
    return h @ wo.T + bo


if __name__ == "__main__":
    INPUT_DIM, HIDDEN_DIM = 16, 32   # num_layers = 3, option='pairwise_TL'

    key = jax.random.PRNGKey(0)
    k_p, k_x1, k_x2 = jax.random.split(key, 3)
    params = init_params(k_p, INPUT_DIM, HIDDEN_DIM)

    # Small batch (single tile, batch padded to the 128-lane tile).
    feat_small = jax.random.normal(k_x1, (8, INPUT_DIM), dtype=jnp.float32)
    out_small = jax.block_until_ready(mlp_head(feat_small, params))
    ref_small = mlp_head_ref(feat_small, params)
    assert out_small.shape == (8, 1)
    assert jnp.allclose(out_small, ref_small, atol=1e-5, rtol=1e-5), "f32 small-batch mismatch"

    # Multi-tile batch with padding (exercises the grid, resident weights and
    # the >=2-step split that keeps both v7x TensorCores busy).
    feat_big = jax.random.normal(k_x2, (1000, INPUT_DIM), dtype=jnp.float32)
    out_big = jax.block_until_ready(mlp_head(feat_big, params))
    ref_big = mlp_head_ref(feat_big, params)
    assert out_big.shape == (1000, 1)
    assert jnp.allclose(out_big, ref_big, atol=1e-5, rtol=1e-5), "f32 multi-tile mismatch"

    # v5e fast config: bf16 feature stream, f32 softplus/accumulation.
    out_v5e = jax.block_until_ready(
        mlp_head(feat_big, params, compute_dtype=jnp.bfloat16,
                 softplus_dtype=jnp.float32))
    assert jnp.allclose(out_v5e, ref_big, atol=5e-2, rtol=5e-2), "bf16-stream mismatch"

    # v6e/v7x fast config: bf16 feature stream + bf16 softplus (EUP-bound win).
    out_v6e = jax.block_until_ready(
        mlp_head(feat_big, params, compute_dtype=jnp.bfloat16,
                 softplus_dtype=jnp.bfloat16))
    assert jnp.allclose(out_v6e, ref_big, atol=1e-1, rtol=5e-2), "bf16-softplus mismatch"

    print("KERNEL_OK")
</pallas_src>

<mosaic_0001>
module attributes {stable_mosaic.version = 11 : i64} {
  func.func @mlp_head_kernel(%arg0: i32, %arg1: memref<128x16xf32, #tpu.memory_space<vmem>>, %arg2: memref<32x16xf32, #tpu.memory_space<vmem>>, %arg3: memref<32x1xf32, #tpu.memory_space<vmem>>, %arg4: memref<32x32xf32, #tpu.memory_space<vmem>>, %arg5: memref<32x1xf32, #tpu.memory_space<vmem>>, %arg6: memref<32x1xf32, #tpu.memory_space<vmem>>, %arg7: memref<1x1xf32, #tpu.memory_space<vmem>>, %arg8: memref<1x128xf32, #tpu.memory_space<vmem>>) attributes {dimension_semantics = [#tpu.dimension_semantics<parallel>], iteration_bounds = array<i64: 1>, scalar_prefetch = 0 : i64, scratch_operands = 0 : i64, tpu.core_type = #tpu.core_type<tc>, window_params = [{transform_indices = @transform_0, window_bounds = array<i64: 128, 16>}, {pipeline_mode = #tpu.pipeline_mode<synchronous>, transform_indices = @transform_1, window_bounds = array<i64: 32, 16>}, {pipeline_mode = #tpu.pipeline_mode<synchronous>, transform_indices = @transform_2, window_bounds = array<i64: 32, 1>}, {pipeline_mode = #tpu.pipeline_mode<synchronous>, transform_indices = @transform_3, window_bounds = array<i64: 32, 32>}, {pipeline_mode = #tpu.pipeline_mode<synchronous>, transform_indices = @transform_4, window_bounds = array<i64: 32, 1>}, {pipeline_mode = #tpu.pipeline_mode<synchronous>, transform_indices = @transform_5, window_bounds = array<i64: 32, 1>}, {pipeline_mode = #tpu.pipeline_mode<synchronous>, transform_indices = @transform_6, window_bounds = array<i64: 1, 1>}, {transform_indices = @transform_7, window_bounds = array<i64: 1, 128>}]} {
    %c0 = arith.constant 0 : index
    %c0_0 = arith.constant 0 : index
    %0 = vector.load %arg1[%c0, %c0_0] : memref<128x16xf32, #tpu.memory_space<vmem>>, vector<128x16xf32>
    %c0_1 = arith.constant 0 : index
    %c0_2 = arith.constant 0 : index
    %1 = vector.load %arg2[%c0_1, %c0_2] : memref<32x16xf32, #tpu.memory_space<vmem>>, vector<32x16xf32>
    %cst = arith.constant dense<0.000000e+00> : vector<32x128xf32>
    %2 = tpu.matmul %1, %0, %cst {dimension_numbers = #tpu.dot_dimension_numbers<[1], [1], [0], [0], [0, 0, 1, 0], [], []>} : vector<32x16xf32>, vector<128x16xf32>, vector<32x128xf32> -> vector<32x128xf32>
    %c0_3 = arith.constant 0 : index
    %c0_4 = arith.constant 0 : index
    %3 = vector.load %arg3[%c0_3, %c0_4] : memref<32x1xf32, #tpu.memory_space<vmem>>, vector<32x1xf32>
    %4 = vector.broadcast %3 : vector<32x1xf32> to vector<32x128xf32>
    %5 = arith.addf %2, %4 : vector<32x128xf32>
    %cst_5 = arith.constant 0.000000e+00 : f32
    %6 = vector.broadcast %cst_5 : f32 to vector<32x128xf32>
    %7 = arith.maximumf %5, %6 : vector<32x128xf32>
    %8 = math.absf %5 : vector<32x128xf32>
    %cst_6 = arith.constant 0.000000e+00 : f32
    %9 = vector.broadcast %cst_6 : f32 to vector<32x128xf32>
    %10 = arith.subf %9, %8 : vector<32x128xf32>
    %11 = math.exp %10 : vector<32x128xf32>
    %12 = math.log1p %11 : vector<32x128xf32>
    %13 = arith.addf %7, %12 : vector<32x128xf32>
    %c0_7 = arith.constant 0 : index
    %c0_8 = arith.constant 0 : index
    %14 = vector.load %arg4[%c0_7, %c0_8] : memref<32x32xf32, #tpu.memory_space<vmem>>, vector<32x32xf32>
    %cst_9 = arith.constant dense<0.000000e+00> : vector<32x128xf32>
    %15 = tpu.matmul %14, %13, %cst_9 {dimension_numbers = #tpu.dot_dimension_numbers<[1], [0], [0], [1], [0, 0, 1, 1], [], []>} : vector<32x32xf32>, vector<32x128xf32>, vector<32x128xf32> -> vector<32x128xf32>
    %c0_10 = arith.constant 0 : index
    %c0_11 = arith.constant 0 : index
    %16 = vector.load %arg5[%c0_10, %c0_11] : memref<32x1xf32, #tpu.memory_space<vmem>>, vector<32x1xf32>
    %17 = vector.broadcast %16 : vector<32x1xf32> to vector<32x128xf32>
    %18 = arith.addf %15, %17 : vector<32x128xf32>
    %cst_12 = arith.constant 0.000000e+00 : f32
    %19 = vector.broadcast %cst_12 : f32 to vector<32x128xf32>
    %20 = arith.maximumf %18, %19 : vector<32x128xf32>
    %21 = math.absf %18 : vector<32x128xf32>
    %cst_13 = arith.constant 0.000000e+00 : f32
    %22 = vector.broadcast %cst_13 : f32 to vector<32x128xf32>
    %23 = arith.subf %22, %21 : vector<32x128xf32>
    %24 = math.exp %23 : vector<32x128xf32>
    %25 = math.log1p %24 : vector<32x128xf32>
    %26 = arith.addf %20, %25 : vector<32x128xf32>
    %c0_14 = arith.constant 0 : index
    %c0_15 = arith.constant 0 : index
    %27 = vector.load %arg6[%c0_14, %c0_15] : memref<32x1xf32, #tpu.memory_space<vmem>>, vector<32x1xf32>
    %28 = vector.broadcast %27 : vector<32x1xf32> to vector<32x128xf32>
    %29 = arith.mulf %28, %26 : vector<32x128xf32>
    %cst_16 = arith.constant dense<0.000000e+00> : vector<128xf32>
    %30 = vector.multi_reduction <add>, %29, %cst_16 [0] : vector<32x128xf32> to vector<128xf32>
    %31 = vector.shape_cast %30 : vector<128xf32> to vector<1x128xf32>
    %c0_17 = arith.constant 0 : index
    %c0_18 = arith.constant 0 : index
    %32 = vector.load %arg7[%c0_17, %c0_18] : memref<1x1xf32, #tpu.memory_space<vmem>>, vector<1x1xf32>
    %33 = vector.broadcast %32 : vector<1x1xf32> to vector<1x128xf32>
    %34 = arith.addf %31, %33 : vector<1x128xf32>
    %c0_19 = arith.constant 0 : index
    %c0_20 = arith.constant 0 : index
    %35 = vector.load %arg8[%c0_19, %c0_20] : memref<1x128xf32, #tpu.memory_space<vmem>>, vector<1x128xf32>
    tpu.vector_store %arg8[%c0_19, %c0_20], %34 {strides = array<i32>} : memref<1x128xf32, #tpu.memory_space<vmem>>, vector<1x128xf32>,
    return
  }
  func.func @transform_0(%arg0: i32) -> (i32, i32) {
    %c0_i32 = arith.constant 0 : i32
    %c0_i32_0 = arith.constant 0 : i32
    return %arg0, %c0_i32 : i32, i32
  }
  func.func @transform_1(%arg0: i32) -> (i32, i32) {
    %c0_i32 = arith.constant 0 : i32
    %c0_i32_0 = arith.constant 0 : i32
    %c0_i32_1 = arith.constant 0 : i32
    return %c0_i32, %c0_i32_0 : i32, i32
  }
  func.func @transform_2(%arg0: i32) -> (i32, i32) {
    %c0_i32 = arith.constant 0 : i32
    %c0_i32_0 = arith.constant 0 : i32
    %c0_i32_1 = arith.constant 0 : i32
    return %c0_i32, %c0_i32_0 : i32, i32
  }
  func.func @transform_3(%arg0: i32) -> (i32, i32) {
    %c0_i32 = arith.constant 0 : i32
    %c0_i32_0 = arith.constant 0 : i32
    %c0_i32_1 = arith.constant 0 : i32
    return %c0_i32, %c0_i32_0 : i32, i32
  }
  func.func @transform_4(%arg0: i32) -> (i32, i32) {
    %c0_i32 = arith.constant 0 : i32
    %c0_i32_0 = arith.constant 0 : i32
    %c0_i32_1 = arith.constant 0 : i32
    return %c0_i32, %c0_i32_0 : i32, i32
  }
  func.func @transform_5(%arg0: i32) -> (i32, i32) {
    %c0_i32 = arith.constant 0 : i32
    %c0_i32_0 = arith.constant 0 : i32
    %c0_i32_1 = arith.constant 0 : i32
    return %c0_i32, %c0_i32_0 : i32, i32
  }
  func.func @transform_6(%arg0: i32) -> (i32, i32) {
    %c0_i32 = arith.constant 0 : i32
    %c0_i32_0 = arith.constant 0 : i32
    %c0_i32_1 = arith.constant 0 : i32
    return %c0_i32, %c0_i32_0 : i32, i32
  }
  func.func @transform_7(%arg0: i32) -> (i32, i32) {
    %c0_i32 = arith.constant 0 : i32
    %c0_i32_0 = arith.constant 0 : i32
    return %c0_i32, %arg0 : i32, i32
  }
}

</mosaic_0001>

<llo_original>
// kernel: tpu_custom_call.1
$region0: #{tpu_custom_call.1}
  #allocation0 [shape = 'u32[]', space=smem, size = 0x4, offset = 0x4, fixed_abs, tag = 'smem constant byte address 0x4 - core index']
  #allocation1 [shape = 'u32[72,128]{1,0:T(1,128)}', space=vmem, size = 0x9000, scoped, tag = 'internal scratch']
  #allocation2 [shape = 'f32[1,1]{1,0:T(1,128)S(1)}', space=vmem, size = 0x200, scoped, tag = 'scoped memory for tpu_custom_call.1']
  %s0 = inlined_call_operand.vmem [shape: f32[128,16], index: 0, kind: input, shape index: {}]
  %s1 = inlined_call_operand.vmem [shape: f32[32,16], index: 1, kind: input, shape index: {}]
  %s2 = inlined_call_operand.vmem [shape: f32[32,1], index: 2, kind: input, shape index: {}]
  %s3 = inlined_call_operand.vmem [shape: f32[32,32], index: 3, kind: input, shape index: {}]
  %s4 = inlined_call_operand.vmem [shape: f32[32,1], index: 4, kind: input, shape index: {}]
  %s5 = inlined_call_operand.vmem [shape: f32[32,1], index: 5, kind: input, shape index: {}]
  %s6 = inlined_call_operand.<no memory space> [shape: f32[1,1], index: 6, kind: input, shape index: {}]
  %s7 = inlined_call_operand.hbm [shape: f32[1,128], index: 7, kind: output, shape index: {}]
  %s8 = sld [smem:[#allocation0]]
  $region38: #{tpu_custom_call.1} parent=0
    _
  %s10 = ssub.s32 1, %s8
  %s11 = scalar_select 0, %s10, %s8
  %v12 = vstv %s6
  %13 = vst [vmem:[#allocation2] sm:$0x1] %v12
  $region1: #{tpu_custom_call.1} parent=0
    #allocation3 [shape = 'u8[512]{0}', space=vmem, size = 0x400, scoped, tag = 'output window, operand 0, single buffered']
    #allocation4 [shape = 's32[1]{0}', space=sflag, size = 0x4, scoped, tag = 'scoped memory for tpu_custom_call.1']
    %14 = vsyncpa [#allocation4], 0
    // Predicated region
    $region2: #{tpu_custom_call.1} parent=1 // pred_check
      _
    $region3: #{tpu_custom_call.1} parent=1 // pred_check_branch
      %16 = sbr.rel (0) target = $region5
    $region4: #{tpu_custom_call.1} parent=1 // pred_region
      _
    $region5: #{tpu_custom_call.1} parent=1 // pred_fallthru
      _
    // Predicated region
    $region6: #{tpu_custom_call.1} parent=1 // pred_check
      _
    $region7: #{tpu_custom_call.1} parent=1 // pred_check_branch
      %18 = sbr.rel (0) target = $region9
    $region8: #{tpu_custom_call.1} parent=1 // pred_region
      _
    $region9: #{tpu_custom_call.1} parent=1 // pred_fallthru
      _
    // Predicated region
    $region10: #{tpu_custom_call.1} parent=1 // pred_check
      _
    $region11: #{tpu_custom_call.1} parent=1 // pred_check_branch
      %20 = sbr.rel (0) target = $region13
    $region12: #{tpu_custom_call.1} parent=1 // pred_region
      _
    $region13: #{tpu_custom_call.1} parent=1 // pred_fallthru
      _
    // Predicated region
    $region14: #{tpu_custom_call.1} parent=1 // pred_check
      _
    $region15: #{tpu_custom_call.1} parent=1 // pred_check_branch
      %22 = sbr.rel (0) target = $region17
    $region16: #{tpu_custom_call.1} parent=1 // pred_region
      _
    $region17: #{tpu_custom_call.1} parent=1 // pred_fallthru
      _
    // Predicated region
    $region18: #{tpu_custom_call.1} parent=1 // pred_check
      _
    $region19: #{tpu_custom_call.1} parent=1 // pred_check_branch
      %24 = sbr.rel (0) target = $region21
    $region20: #{tpu_custom_call.1} parent=1 // pred_region
      _
    $region21: #{tpu_custom_call.1} parent=1 // pred_fallthru
      _
    // Predicated region
    $region22: #{tpu_custom_call.1} parent=1 // pred_check
      _
    $region23: #{tpu_custom_call.1} parent=1 // pred_check_branch
      %26 = sbr.rel (0) target = $region25
    $region24: #{tpu_custom_call.1} parent=1 // pred_region
      _
    $region25: #{tpu_custom_call.1} parent=1 // pred_fallthru
      _
    // Predicated region
    $region26: #{tpu_custom_call.1} parent=1 // pred_check
      _
    $region27: #{tpu_custom_call.1} parent=1 // pred_check_branch
      %28 = sbr.rel (0) target = $region29
    $region28: #{tpu_custom_call.1} parent=1 // pred_region
      _
    $region29: #{tpu_custom_call.1} parent=1 // pred_fallthru
      _
    %v29 = vld [vmem:[%s0] sm:$0xff]
    %v30 = vld [vmem:[%s0 + $0x8] sm:$0xff]
    %v31 = vld [vmem:[%s0 + $0x10] sm:$0xff]
    %v32 = vld [vmem:[%s0 + $0x18] sm:$0xff]
    %v33 = vld [vmem:[%s0 + $0x20] sm:$0xff]
    %v34 = vld [vmem:[%s0 + $0x28] sm:$0xff]
    %v35 = vld [vmem:[%s0 + $0x30] sm:$0xff]
    %v36 = vld [vmem:[%s0 + $0x38] sm:$0xff]
    %v37 = vld [vmem:[%s0 + $0x40] sm:$0xff]
    %v38 = vld [vmem:[%s0 + $0x48] sm:$0xff]
    %v39 = vld [vmem:[%s0 + $0x50] sm:$0xff]
    %v40 = vld [vmem:[%s0 + $0x58] sm:$0xff]
    %v41 = vld [vmem:[%s0 + $0x60] sm:$0xff]
    %v42 = vld [vmem:[%s0 + $0x68] sm:$0xff]
    %v43 = vld [vmem:[%s0 + $0x70] sm:$0xff]
    %v44 = vld [vmem:[%s0 + $0x78] sm:$0xff]
    %v45 = vld [vmem:[%s1] sm:$0xff]
    %v46 = vld [vmem:[%s1 + $0x8] sm:$0xff]
    %v47 = vld [vmem:[%s1 + $0x10] sm:$0xff]
    %v48 = vld [vmem:[%s1 + $0x18] sm:$0xff]
    %v49 = vld [vmem:[%s2] sm:$0xff]
    %v50 = vld [vmem:[%s2 + $0x8] sm:$0xff]
    %v51 = vld [vmem:[%s2 + $0x10] sm:$0xff]
    %v52 = vld [vmem:[%s2 + $0x18] sm:$0xff]
    %54 = vset.pattern.permute.xlu0 0
    %55 = vperm.xlu0 %54, %v49
    %v56 = vpop.permute.xlu0 %55
    %59 = vset.pattern.permute.xlu0 0
    %60 = vperm.xlu0 %59, %v50
    %v61 = vpop.permute.xlu0 %60
    %64 = vset.pattern.permute.xlu0 0
    %65 = vperm.xlu0 %64, %v51
    %v66 = vpop.permute.xlu0 %65
    %69 = vset.pattern.permute.xlu0 0
    %70 = vperm.xlu0 %69, %v52
    %v71 = vpop.permute.xlu0 %70
    %vm73 = vcmask 130048
    %v75 = vsel %vm73, %v45, 0
    %v78 = vsel %vm73, %v46, 0
    %v81 = vsel %vm73, %v47, 0
    %v84 = vsel %vm73, %v48, 0
    %v87 = vsel %vm73, %v29, 0
    %v90 = vsel %vm73, %v30, 0
    %v93 = vsel %vm73, %v31, 0
    %v96 = vsel %vm73, %v32, 0
    %v99 = vsel %vm73, %v33, 0
    %v102 = vsel %vm73, %v34, 0
    %v105 = vsel %vm73, %v35, 0
    %v108 = vsel %vm73, %v36, 0
    %v111 = vsel %vm73, %v37, 0
    %v114 = vsel %vm73, %v38, 0
    %v117 = vsel %vm73, %v39, 0
    %v120 = vsel %vm73, %v40, 0
    %v123 = vsel %vm73, %v41, 0
    %v126 = vsel %vm73, %v42, 0
    %v129 = vsel %vm73, %v43, 0
    %v132 = vsel %vm73, %v44, 0
    %134 = vmatpush.xpose.msra.mxu0 %v132
    %135 = vmatpush.xpose.msra.mxu0 %v129
    %136 = vmatpush.xpose.msra.mxu0 %v126
    %137 = vmatpush.xpose.msra.mxu0 %v123
    %138 = vmatpush.xpose.msra.mxu0 %v120
    %139 = vmatpush.xpose.msra.mxu0 %v117
    %140 = vmatpush.xpose.msra.mxu0 %v114
    %141 = vmatpush.xpose.msra.mxu0 %v111
    %142 = vmatpush.xpose.msra.mxu0 %v108
    %143 = vmatpush.xpose.msra.mxu0 %v105
    %144 = vmatpush.xpose.msra.mxu0 %v102
    %145 = vmatpush.xpose.msra.mxu0 %v99
    %146 = vmatpush.xpose.msra.mxu0 %v96
    %147 = vmatpush.xpose.msra.mxu0 %v93
    %148 = vmatpush.xpose.msra.mxu0 %v90
    %149 = vmatpush.xpose.msra.mxu0 %v87
    %150 = vmatmul.f32.gmra.mxu0 %v75
    %v151 = vpop.f32.mrf.mxu0
    %v152 = vadd.f32 %v56, %v151
    %153 = vmatmul.f32.gmra.mxu0 %v78
    %v154 = vpop.f32.mrf.mxu0
    %v155 = vadd.f32 %v61, %v154
    %156 = vmatmul.f32.gmra.mxu0 %v81
    %v157 = vpop.f32.mrf.mxu0
    %v158 = vadd.f32 %v66, %v157
    %159 = vmatmul.f32.gmra.mxu0 %v84
    %v160 = vpop.f32.mrf.mxu0
    %v161 = vadd.f32 %v71, %v160
    %162 = vdwg.mxu0
    %v163 = vmax.f32 %v152, 0.0
    %v164 = vmax.f32 %v155, 0.0
    %v165 = vmax.f32 %v158, 0.0
    %v166 = vmax.f32 %v161, 0.0
    %v167 = vand.u32 2147483647, %v152
    %v168 = vand.u32 2147483647, %v155
    %v169 = vand.u32 2147483647, %v158
    %v170 = vand.u32 2147483647, %v161
    %v171 = vsub.f32 0.0, %v167
    %v172 = vsub.f32 0.0, %v168
    %v173 = vsub.f32 0.0, %v169
    %v174 = vsub.f32 0.0, %v170
    %v175 = vmul.f32 %v171, 1.442695
    %v176 = vpow.pop %v175
    %v177 = vmul.f32 %v172, 1.442695
    %v178 = vpow.pop %v177
    %v179 = vmul.f32 %v173, 1.442695
    %v180 = vpow.pop %v179
    %v181 = vmul.f32 %v174, 1.442695
    %v182 = vpow.pop %v181
    %v183 = vadd.f32 %v176, 1.0
    %v184 = vlog2.pop %v183
    %v185 = vmul.f32 %v184, 0.6931472
    %v186 = vmul.f32 -0.5, %v176
    %v187 = vadd.f32 %v186, 1.0
    %v188 = vmul.f32 %v187, %v176
    %v189 = vand.u32 2147483647, %v176
    %vm190 = vcmp.lt.f32.partialorder %v189, 0.0004427343
    %v191 = vsel %vm190, %v188, %v185
    %v192 = vadd.f32 %v178, 1.0
    %v193 = vlog2.pop %v192
    %v194 = vmul.f32 %v193, 0.6931472
    %v195 = vmul.f32 -0.5, %v178
    %v196 = vadd.f32 %v195, 1.0
    %v197 = vmul.f32 %v196, %v178
    %v198 = vand.u32 2147483647, %v178
    %vm199 = vcmp.lt.f32.partialorder %v198, 0.0004427343
    %v200 = vsel %vm199, %v197, %v194
    %v201 = vadd.f32 %v180, 1.0
    %v202 = vlog2.pop %v201
    %v203 = vmul.f32 %v202, 0.6931472
    %v204 = vmul.f32 -0.5, %v180
    %v205 = vadd.f32 %v204, 1.0
    %v206 = vmul.f32 %v205, %v180
    %v207 = vand.u32 2147483647, %v180
    %vm208 = vcmp.lt.f32.partialorder %v207, 0.0004427343
    %v209 = vsel %vm208, %v206, %v203
    %v210 = vadd.f32 %v182, 1.0
    %v211 = vlog2.pop %v210
    %v212 = vmul.f32 %v211, 0.6931472
    %v213 = vmul.f32 -0.5, %v182
    %v214 = vadd.f32 %v213, 1.0
    %v215 = vmul.f32 %v214, %v182
    %v216 = vand.u32 2147483647, %v182
    %vm217 = vcmp.lt.f32.partialorder %v216, 0.0004427343
    %v218 = vsel %vm217, %v215, %v212
    %v219 = vadd.f32 %v163, %v191
    %v220 = vadd.f32 %v164, %v200
    %v221 = vadd.f32 %v165, %v209
    %v222 = vadd.f32 %v166, %v218
    %v223 = vld [vmem:[%s3] sm:$0xff]
    %v224 = vld [vmem:[%s3 + $0x8] sm:$0xff]
    %v225 = vld [vmem:[%s3 + $0x10] sm:$0xff]
    %v226 = vld [vmem:[%s3 + $0x18] sm:$0xff]
    %v227 = vld [vmem:[%s4] sm:$0xff]
    %v228 = vld [vmem:[%s4 + $0x8] sm:$0xff]
    %v229 = vld [vmem:[%s4 + $0x10] sm:$0xff]
    %v230 = vld [vmem:[%s4 + $0x18] sm:$0xff]
    %232 = vset.pattern.permute.xlu0 0
    %233 = vperm.xlu0 %232, %v227
    %v234 = vpop.permute.xlu0 %233
    %237 = vset.pattern.permute.xlu0 0
    %238 = vperm.xlu0 %237, %v228
    %v239 = vpop.permute.xlu0 %238
    %242 = vset.pattern.permute.xlu0 0
    %243 = vperm.xlu0 %242, %v229
    %v244 = vpop.permute.xlu0 %243
    %247 = vset.pattern.permute.xlu0 0
    %248 = vperm.xlu0 %247, %v230
    %v249 = vpop.permute.xlu0 %248
    %vm251 = vcmask 261120
    %v253 = vsel %vm251, %v223, 0
    %v256 = vsel %vm251, %v224, 0
    %v259 = vsel %vm251, %v225, 0
    %v262 = vsel %vm251, %v226, 0
    %264 = vmatpush.msra.mxu0 0.0
    %265 = vmatpush.msra.mxu0 0.0
    %266 = vmatpush.msra.mxu0 0.0
    %267 = vmatpush.msra.mxu0 0.0
    %268 = vmatpush.msra.mxu0 0.0
    %269 = vmatpush.msra.mxu0 0.0
    %270 = vmatpush.msra.mxu0 0.0
    %271 = vmatpush.msra.mxu0 0.0
    %272 = vmatpush.msra.mxu0 0.0
    %273 = vmatpush.msra.mxu0 0.0
    %274 = vmatpush.msra.mxu0 0.0
    %275 = vmatpush.msra.mxu0 0.0
    %276 = vmatpush.msra.mxu0 %v222
    %277 = vmatpush.msra.mxu0 %v221
    %278 = vmatpush.msra.mxu0 %v220
    %279 = vmatpush.msra.mxu0 %v219
    %280 = vmatmul.f32.gmra.mxu0 %v253
    %v281 = vpop.f32.mrf.mxu0
    %v282 = vadd.f32 %v234, %v281
    %283 = vmatmul.f32.gmra.mxu0 %v256
    %v284 = vpop.f32.mrf.mxu0
    %v285 = vadd.f32 %v239, %v284
    %286 = vmatmul.f32.gmra.mxu0 %v259
    %v287 = vpop.f32.mrf.mxu0
    %v288 = vadd.f32 %v244, %v287
    %289 = vmatmul.f32.gmra.mxu0 %v262
    %v290 = vpop.f32.mrf.mxu0
    %v291 = vadd.f32 %v249, %v290
    %292 = vdwg.mxu0
    %v293 = vmax.f32 %v282, 0.0
    %v294 = vmax.f32 %v285, 0.0
    %v295 = vmax.f32 %v288, 0.0
    %v296 = vmax.f32 %v291, 0.0
    %v297 = vand.u32 2147483647, %v282
    %v298 = vand.u32 2147483647, %v285
    %v299 = vand.u32 2147483647, %v288
    %v300 = vand.u32 2147483647, %v291
    %v301 = vsub.f32 0.0, %v297
    %v302 = vsub.f32 0.0, %v298
    %v303 = vsub.f32 0.0, %v299
    %v304 = vsub.f32 0.0, %v300
    %v305 = vmul.f32 %v301, 1.442695
    %v306 = vpow.pop %v305
    %v307 = vmul.f32 %v302, 1.442695
    %v308 = vpow.pop %v307
    %v309 = vmul.f32 %v303, 1.442695
    %v310 = vpow.pop %v309
    %v311 = vmul.f32 %v304, 1.442695
    %v312 = vpow.pop %v311
    %v313 = vadd.f32 %v306, 1.0
    %v314 = vlog2.pop %v313
    %v315 = vmul.f32 %v314, 0.6931472
    %v316 = vmul.f32 -0.5, %v306
    %v317 = vadd.f32 %v316, 1.0
    %v318 = vmul.f32 %v317, %v306
    %v319 = vand.u32 2147483647, %v306
    %vm320 = vcmp.lt.f32.partialorder %v319, 0.0004427343
    %v321 = vsel %vm320, %v318, %v315
    %v322 = vadd.f32 %v308, 1.0
    %v323 = vlog2.pop %v322
    %v324 = vmul.f32 %v323, 0.6931472
    %v325 = vmul.f32 -0.5, %v308
    %v326 = vadd.f32 %v325, 1.0
    %v327 = vmul.f32 %v326, %v308
    %v328 = vand.u32 2147483647, %v308
    %vm329 = vcmp.lt.f32.partialorder %v328, 0.0004427343
    %v330 = vsel %vm329, %v327, %v324
    %v331 = vadd.f32 %v310, 1.0
    %v332 = vlog2.pop %v331
    %v333 = vmul.f32 %v332, 0.6931472
    %v334 = vmul.f32 -0.5, %v310
    %v335 = vadd.f32 %v334, 1.0
    %v336 = vmul.f32 %v335, %v310
    %v337 = vand.u32 2147483647, %v310
    %vm338 = vcmp.lt.f32.partialorder %v337, 0.0004427343
    %v339 = vsel %vm338, %v336, %v333
    %v340 = vadd.f32 %v312, 1.0
    %v341 = vlog2.pop %v340
    %v342 = vmul.f32 %v341, 0.6931472
    %v343 = vmul.f32 -0.5, %v312
    %v344 = vadd.f32 %v343, 1.0
    %v345 = vmul.f32 %v344, %v312
    %v346 = vand.u32 2147483647, %v312
    %vm347 = vcmp.lt.f32.partialorder %v346, 0.0004427343
    %v348 = vsel %vm347, %v345, %v342
    %v349 = vadd.f32 %v293, %v321
    %v350 = vadd.f32 %v294, %v330
    %v351 = vadd.f32 %v295, %v339
    %v352 = vadd.f32 %v296, %v348
    %v353 = vld [vmem:[%s5] sm:$0xff]
    %v354 = vld [vmem:[%s5 + $0x8] sm:$0xff]
    %v355 = vld [vmem:[%s5 + $0x10] sm:$0xff]
    %v356 = vld [vmem:[%s5 + $0x18] sm:$0xff]
    %358 = vset.pattern.permute.xlu0 0
    %359 = vperm.xlu0 %358, %v353
    %v360 = vpop.permute.xlu0 %359
    %363 = vset.pattern.permute.xlu0 0
    %364 = vperm.xlu0 %363, %v354
    %v365 = vpop.permute.xlu0 %364
    %368 = vset.pattern.permute.xlu0 0
    %369 = vperm.xlu0 %368, %v355
    %v370 = vpop.permute.xlu0 %369
    %373 = vset.pattern.permute.xlu0 0
    %374 = vperm.xlu0 %373, %v356
    %v375 = vpop.permute.xlu0 %374
    %v377 = vmul.f32 %v360, %v349
    %v378 = vmul.f32 %v365, %v350
    %v379 = vmul.f32 %v370, %v351
    %v380 = vmul.f32 %v375, %v352
    %v381 = vadd.f32 %v377, %v378
    %v382 = vadd.f32 %v381, %v379
    %v383 = vadd.f32 %v382, %v380
    %v384 = vrot.slane %v383, 4
    %v385 = vadd.f32 %v383, %v384
    %v386 = vrot.slane %v385, 2
    %v387 = vadd.f32 %v385, %v386
    %v388 = vrot.slane %v387, 1
    %v389 = vadd.f32 %v387, %v388
    %v390 = vld [vmem:[#allocation2] sm:$0x1]
    %392 = vset.pattern.permute.xlu0 0
    %393 = vperm.xlu0 %392, %v390
    %v394 = vpop.permute.xlu0 %393
    %v396 = vperm.slane %v394, 0
    %v397 = vadd.f32 %v389, %v396
    %398 = vst [vmem:[#allocation3] sm:$0x1] %v397
    // Predicated region
    $region30: #{tpu_custom_call.1} parent=1 // pred_check
      _
    $region31: #{tpu_custom_call.1} parent=1 // pred_check_branch
      %400 = sbr.rel (0) target = $region33
    $region32: #{tpu_custom_call.1} parent=1 // pred_region
      %402 = vsyncadd [#allocation4], 0
      %s404 = sshll.u32 [#allocation3], 4
      %s405 = int_to_ptr.vmem [resolvable:$true] %s404
      %s406 = sshll.u32 %s7, 4
      %s407 = int_to_ptr.hbm [resolvable:$true] %s406
      %409 = dma.vmem_to_hbm [thread:$0]  %s405, 16, %s407, [#allocation4]
    $region33: #{tpu_custom_call.1} parent=1 // pred_fallthru
      _
    // Predicated region
    $region34: #{tpu_custom_call.1} parent=1 // pred_check
      _
    $region35: #{tpu_custom_call.1} parent=1 // pred_check_branch
      %411 = sbr.rel (0) target = $region37
    $region36: #{tpu_custom_call.1} parent=1 // pred_region
      %413 = dma.done [#allocation4], 16
    $region37: #{tpu_custom_call.1} parent=1 // pred_fallthru
      _
    %414 = vsyncpa [#allocation4], 1

</llo_original>
